<compile_context>
chip_gen: v7x
topology: tpu7x:2x2x1
jax: 0.10.0
libtpu: 0.0.40
codegen_flags: <defaults>
</compile_context>

<pallas_src>
import jax
import jax.numpy as jnp
from jax import lax
from jax.experimental import pallas as pl
from jax.experimental.pallas import tpu as pltpu


def rnn_tagger_kernel(ids_ref, wih_t_ref, whh_t_ref, b_rnn_ref,
                      who_t_ref, bho_ref, out_ref):
    T, C = out_ref.shape
    H = whh_t_ref.shape[0]

    # ---- hoist loop-invariant reads: W_hh^T (H,H ~ a few vregs) + bias ----
    whh = whh_t_ref[...]                       # (H, H)
    b_rnn = b_rnn_ref[...]                     # (1, H)  = b_ih + b_hh

    # ---- unrolled recurrence: h_t = tanh(W_ih[:, id_t] + b + h_{t-1} W_hh^T)
    # The "one-hot @ W_ih^T" of the PyTorch module is exactly a row gather of
    # W_ih^T, so x_t is fetched with a dynamic sublane slice driven by the
    # SMEM-resident token id.  Gathers of different steps are independent, so
    # the unrolled schedule can overlap them with the serial tanh/matmul chain.
    h = jnp.zeros((1, H), jnp.float32)         # init_hidden() == zeros
    hs = []
    for t in range(T):                         # T is static and small -> unroll
        idx = ids_ref[t]                       # SMEM scalar read
        x_row = wih_t_ref[pl.ds(idx, 1), :]    # (1, H) gathered embedding row
        h = jnp.tanh(x_row + b_rnn
                     + jnp.dot(h, whh, preferred_element_type=jnp.float32))
        hs.append(h)
    hs = jnp.concatenate(hs, axis=0)           # (T, H), stays in registers

    # ---- hidden2tag Linear + numerically-stable log_softmax (dim=1) -------
    tag = (jnp.dot(hs, who_t_ref[...], preferred_element_type=jnp.float32)
           + bho_ref[...])                     # (T, C)
    m = jnp.max(tag, axis=-1, keepdims=True)
    s = tag - m
    lse = jnp.log(jnp.sum(jnp.exp(s), axis=-1, keepdims=True))
    out_ref[...] = s - lse                     # single bulk (T, C) store
    # TODO(synk): C=8 / H=32 leave the lane axis mostly masked; padding C/H to
    # 128 (and slicing outside) would make the epilogue store lane-dense.


def rnn_tagger_forward(sentence, params):
    """sentence: int32[T] token ids. Returns f32[T, tagset] log-probs."""
    T = sentence.shape[0]
    H, V = params["w_ih"].shape
    C = params["w_ho"].shape[0]

    # Clamp ids so the in-kernel row gather can never read out of bounds
    # (the PyTorch scatter_ would error on OOB ids anyway).
    ids = jnp.clip(sentence.astype(jnp.int32), 0, V - 1)
    b_rnn = (params["b_ih"] + params["b_hh"]).reshape(1, H).astype(jnp.float32)

    inputs = (
        ids,                                          # int32[T]   -> SMEM
        params["w_ih"].T.astype(jnp.float32),         # (V, H)     -> VMEM
        params["w_hh"].T.astype(jnp.float32),         # (H, H)
        b_rnn,                                        # (1, H)
        params["w_ho"].T.astype(jnp.float32),         # (H, C)
        params["b_ho"].reshape(1, C).astype(jnp.float32),
    )
    smem = pl.BlockSpec(memory_space=pltpu.MemorySpace.SMEM)
    vmem = pl.BlockSpec(memory_space=pltpu.MemorySpace.VMEM)

    cost = pl.CostEstimate(
        flops=2 * T * H * H + 2 * T * H * C,
        transcendentals=T * H + T * C,                # tanh + exp
        bytes_accessed=4 * (T + V * H + H * H + H + H * C + C + T * C),
    )

    return pl.pallas_call(
        rnn_tagger_kernel,
        out_shape=jax.ShapeDtypeStruct((T, C), jnp.float32),
        in_specs=[smem, vmem, vmem, vmem, vmem, vmem],
        out_specs=vmem,
        cost_estimate=cost,
    )(*inputs)


def rnn_tagger_reference(sentence, params):
    """Pure-JAX reference mirroring the PyTorch forward, for validation."""
    H, V = params["w_ih"].shape
    x = jax.nn.one_hot(sentence, V, dtype=jnp.float32)            # (T, V)
    proj = x @ params["w_ih"].T + params["b_ih"]                  # (T, H)

    def step(h, p):
        h_new = jnp.tanh(p + h @ params["w_hh"].T + params["b_hh"])
        return h_new, h_new

    _, hs = lax.scan(step, jnp.zeros((H,), jnp.float32), proj)    # (T, H)
    tag = hs @ params["w_ho"].T + params["b_ho"]                  # (T, C)
    return jax.nn.log_softmax(tag, axis=1)


if __name__ == "__main__":
    # The module's forward only works when embedding_dim == vocab_size
    # (the one-hot of width vocab_size is fed directly to the RNN).
    vocab_size = 2000     # matches the module's global; = embedding_dim
    hidden_dim = 32
    tagset_size = 8
    seq_len = 8

    key = jax.random.PRNGKey(0)
    k = jax.random.split(key, 7)
    bound = 1.0 / jnp.sqrt(hidden_dim)  # PyTorch nn.RNN / nn.Linear uniform init
    params = {
        "w_ih": jax.random.uniform(k[0], (hidden_dim, vocab_size), jnp.float32, -bound, bound),
        "w_hh": jax.random.uniform(k[1], (hidden_dim, hidden_dim), jnp.float32, -bound, bound),
        "b_ih": jax.random.uniform(k[2], (hidden_dim,), jnp.float32, -bound, bound),
        "b_hh": jax.random.uniform(k[3], (hidden_dim,), jnp.float32, -bound, bound),
        "w_ho": jax.random.uniform(k[4], (tagset_size, hidden_dim), jnp.float32, -bound, bound),
        "b_ho": jax.random.uniform(k[5], (tagset_size,), jnp.float32, -bound, bound),
    }
    sentence = jax.random.randint(k[6], (seq_len,), 0, vocab_size, dtype=jnp.int32)

    out = jax.block_until_ready(rnn_tagger_forward(sentence, params))
    ref = jax.block_until_ready(rnn_tagger_reference(sentence, params))

    assert out.shape == (seq_len, tagset_size)
    assert jnp.allclose(out, ref, atol=1e-5, rtol=1e-5), (out, ref)
    print("KERNEL_OK")
</pallas_src>

<mosaic_0001>
module attributes {stable_mosaic.version = 11 : i64} {
  func.func @rnn_tagger_kernel(%arg0: memref<8xi32, #tpu.memory_space<smem>>, %arg1: memref<2000x32xf32, #tpu.memory_space<vmem>>, %arg2: memref<32x32xf32, #tpu.memory_space<vmem>>, %arg3: memref<1x32xf32, #tpu.memory_space<vmem>>, %arg4: memref<32x8xf32, #tpu.memory_space<vmem>>, %arg5: memref<1x8xf32, #tpu.memory_space<vmem>>, %arg6: memref<8x8xf32, #tpu.memory_space<vmem>>) attributes {dimension_semantics = [], scalar_prefetch = 0 : i64, scratch_operands = 0 : i64, tpu.core_type = #tpu.core_type<tc>} {
    %c0 = arith.constant 0 : index
    %c0_0 = arith.constant 0 : index
    %0 = vector.load %arg2[%c0, %c0_0] : memref<32x32xf32, #tpu.memory_space<vmem>>, vector<32x32xf32>
    %c0_1 = arith.constant 0 : index
    %c0_2 = arith.constant 0 : index
    %1 = vector.load %arg3[%c0_1, %c0_2] : memref<1x32xf32, #tpu.memory_space<vmem>>, vector<1x32xf32>
    %cst = arith.constant 0.000000e+00 : f32
    %2 = vector.broadcast %cst : f32 to vector<1x32xf32>
    %c0_3 = arith.constant 0 : index
    %3 = memref.load %arg0[%c0_3] : memref<8xi32, #tpu.memory_space<smem>>
    %4 = arith.index_cast %3 : i32 to index
    %c0_4 = arith.constant 0 : index
    %5 = vector.load %arg1[%4, %c0_4] : memref<2000x32xf32, #tpu.memory_space<vmem>>, vector<1x32xf32>
    %6 = arith.addf %5, %1 : vector<1x32xf32>
    %cst_5 = arith.constant dense<0.000000e+00> : vector<1x32xf32>
    %7 = tpu.matmul %2, %0, %cst_5 {dimension_numbers = #tpu.dot_dimension_numbers<[1], [0], [0], [1], [0, 0, 1, 1], [], []>} : vector<1x32xf32>, vector<32x32xf32>, vector<1x32xf32> -> vector<1x32xf32>
    %8 = arith.addf %6, %7 : vector<1x32xf32>
    %9 = math.tanh %8 : vector<1x32xf32>
    %c1 = arith.constant 1 : index
    %10 = memref.load %arg0[%c1] : memref<8xi32, #tpu.memory_space<smem>>
    %11 = arith.index_cast %10 : i32 to index
    %c0_6 = arith.constant 0 : index
    %12 = vector.load %arg1[%11, %c0_6] : memref<2000x32xf32, #tpu.memory_space<vmem>>, vector<1x32xf32>
    %13 = arith.addf %12, %1 : vector<1x32xf32>
    %cst_7 = arith.constant dense<0.000000e+00> : vector<1x32xf32>
    %14 = tpu.matmul %9, %0, %cst_7 {dimension_numbers = #tpu.dot_dimension_numbers<[1], [0], [0], [1], [0, 0, 1, 1], [], []>} : vector<1x32xf32>, vector<32x32xf32>, vector<1x32xf32> -> vector<1x32xf32>
    %15 = arith.addf %13, %14 : vector<1x32xf32>
    %16 = math.tanh %15 : vector<1x32xf32>
    %c2 = arith.constant 2 : index
    %17 = memref.load %arg0[%c2] : memref<8xi32, #tpu.memory_space<smem>>
    %18 = arith.index_cast %17 : i32 to index
    %c0_8 = arith.constant 0 : index
    %19 = vector.load %arg1[%18, %c0_8] : memref<2000x32xf32, #tpu.memory_space<vmem>>, vector<1x32xf32>
    %20 = arith.addf %19, %1 : vector<1x32xf32>
    %cst_9 = arith.constant dense<0.000000e+00> : vector<1x32xf32>
    %21 = tpu.matmul %16, %0, %cst_9 {dimension_numbers = #tpu.dot_dimension_numbers<[1], [0], [0], [1], [0, 0, 1, 1], [], []>} : vector<1x32xf32>, vector<32x32xf32>, vector<1x32xf32> -> vector<1x32xf32>
    %22 = arith.addf %20, %21 : vector<1x32xf32>
    %23 = math.tanh %22 : vector<1x32xf32>
    %c3 = arith.constant 3 : index
    %24 = memref.load %arg0[%c3] : memref<8xi32, #tpu.memory_space<smem>>
    %25 = arith.index_cast %24 : i32 to index
    %c0_10 = arith.constant 0 : index
    %26 = vector.load %arg1[%25, %c0_10] : memref<2000x32xf32, #tpu.memory_space<vmem>>, vector<1x32xf32>
    %27 = arith.addf %26, %1 : vector<1x32xf32>
    %cst_11 = arith.constant dense<0.000000e+00> : vector<1x32xf32>
    %28 = tpu.matmul %23, %0, %cst_11 {dimension_numbers = #tpu.dot_dimension_numbers<[1], [0], [0], [1], [0, 0, 1, 1], [], []>} : vector<1x32xf32>, vector<32x32xf32>, vector<1x32xf32> -> vector<1x32xf32>
    %29 = arith.addf %27, %28 : vector<1x32xf32>
    %30 = math.tanh %29 : vector<1x32xf32>
    %c4 = arith.constant 4 : index
    %31 = memref.load %arg0[%c4] : memref<8xi32, #tpu.memory_space<smem>>
    %32 = arith.index_cast %31 : i32 to index
    %c0_12 = arith.constant 0 : index
    %33 = vector.load %arg1[%32, %c0_12] : memref<2000x32xf32, #tpu.memory_space<vmem>>, vector<1x32xf32>
    %34 = arith.addf %33, %1 : vector<1x32xf32>
    %cst_13 = arith.constant dense<0.000000e+00> : vector<1x32xf32>
    %35 = tpu.matmul %30, %0, %cst_13 {dimension_numbers = #tpu.dot_dimension_numbers<[1], [0], [0], [1], [0, 0, 1, 1], [], []>} : vector<1x32xf32>, vector<32x32xf32>, vector<1x32xf32> -> vector<1x32xf32>
    %36 = arith.addf %34, %35 : vector<1x32xf32>
    %37 = math.tanh %36 : vector<1x32xf32>
    %c5 = arith.constant 5 : index
    %38 = memref.load %arg0[%c5] : memref<8xi32, #tpu.memory_space<smem>>
    %39 = arith.index_cast %38 : i32 to index
    %c0_14 = arith.constant 0 : index
    %40 = vector.load %arg1[%39, %c0_14] : memref<2000x32xf32, #tpu.memory_space<vmem>>, vector<1x32xf32>
    %41 = arith.addf %40, %1 : vector<1x32xf32>
    %cst_15 = arith.constant dense<0.000000e+00> : vector<1x32xf32>
    %42 = tpu.matmul %37, %0, %cst_15 {dimension_numbers = #tpu.dot_dimension_numbers<[1], [0], [0], [1], [0, 0, 1, 1], [], []>} : vector<1x32xf32>, vector<32x32xf32>, vector<1x32xf32> -> vector<1x32xf32>
    %43 = arith.addf %41, %42 : vector<1x32xf32>
    %44 = math.tanh %43 : vector<1x32xf32>
    %c6 = arith.constant 6 : index
    %45 = memref.load %arg0[%c6] : memref<8xi32, #tpu.memory_space<smem>>
    %46 = arith.index_cast %45 : i32 to index
    %c0_16 = arith.constant 0 : index
    %47 = vector.load %arg1[%46, %c0_16] : memref<2000x32xf32, #tpu.memory_space<vmem>>, vector<1x32xf32>
    %48 = arith.addf %47, %1 : vector<1x32xf32>
    %cst_17 = arith.constant dense<0.000000e+00> : vector<1x32xf32>
    %49 = tpu.matmul %44, %0, %cst_17 {dimension_numbers = #tpu.dot_dimension_numbers<[1], [0], [0], [1], [0, 0, 1, 1], [], []>} : vector<1x32xf32>, vector<32x32xf32>, vector<1x32xf32> -> vector<1x32xf32>
    %50 = arith.addf %48, %49 : vector<1x32xf32>
    %51 = math.tanh %50 : vector<1x32xf32>
    %c7 = arith.constant 7 : index
    %52 = memref.load %arg0[%c7] : memref<8xi32, #tpu.memory_space<smem>>
    %53 = arith.index_cast %52 : i32 to index
    %c0_18 = arith.constant 0 : index
    %54 = vector.load %arg1[%53, %c0_18] : memref<2000x32xf32, #tpu.memory_space<vmem>>, vector<1x32xf32>
    %55 = arith.addf %54, %1 : vector<1x32xf32>
    %cst_19 = arith.constant dense<0.000000e+00> : vector<1x32xf32>
    %56 = tpu.matmul %51, %0, %cst_19 {dimension_numbers = #tpu.dot_dimension_numbers<[1], [0], [0], [1], [0, 0, 1, 1], [], []>} : vector<1x32xf32>, vector<32x32xf32>, vector<1x32xf32> -> vector<1x32xf32>
    %57 = arith.addf %55, %56 : vector<1x32xf32>
    %58 = math.tanh %57 : vector<1x32xf32>
    %59 = tpu.concatenate %9, %16, %23, %30, %37, %44, %51, %58 in 0 : vector<1x32xf32>, vector<1x32xf32>, vector<1x32xf32>, vector<1x32xf32>, vector<1x32xf32>, vector<1x32xf32>, vector<1x32xf32>, vector<1x32xf32> -> vector<8x32xf32>
    %c0_20 = arith.constant 0 : index
    %c0_21 = arith.constant 0 : index
    %60 = vector.load %arg4[%c0_20, %c0_21] : memref<32x8xf32, #tpu.memory_space<vmem>>, vector<32x8xf32>
    %cst_22 = arith.constant dense<0.000000e+00> : vector<8x8xf32>
    %61 = tpu.matmul %59, %60, %cst_22 {dimension_numbers = #tpu.dot_dimension_numbers<[1], [0], [0], [1], [0, 0, 1, 1], [], []>} : vector<8x32xf32>, vector<32x8xf32>, vector<8x8xf32> -> vector<8x8xf32>
    %c0_23 = arith.constant 0 : index
    %c0_24 = arith.constant 0 : index
    %62 = vector.load %arg5[%c0_23, %c0_24] : memref<1x8xf32, #tpu.memory_space<vmem>>, vector<1x8xf32>
    %63 = vector.broadcast %62 : vector<1x8xf32> to vector<8x8xf32>
    %64 = arith.addf %61, %63 : vector<8x8xf32>
    %cst_25 = arith.constant dense<0xFF800000> : vector<8xf32>
    %65 = vector.multi_reduction <maximumf>, %64, %cst_25 [1] : vector<8x8xf32> to vector<8xf32>
    %66 = vector.shape_cast %65 : vector<8xf32> to vector<8x1xf32>
    %67 = vector.broadcast %66 : vector<8x1xf32> to vector<8x8xf32>
    %68 = arith.subf %64, %67 : vector<8x8xf32>
    %69 = math.exp %68 : vector<8x8xf32>
    %cst_26 = arith.constant dense<0.000000e+00> : vector<8xf32>
    %70 = vector.multi_reduction <add>, %69, %cst_26 [1] : vector<8x8xf32> to vector<8xf32>
    %71 = vector.shape_cast %70 : vector<8xf32> to vector<8x1xf32>
    %72 = math.log %71 : vector<8x1xf32>
    %73 = vector.broadcast %72 : vector<8x1xf32> to vector<8x8xf32>
    %74 = arith.subf %68, %73 : vector<8x8xf32>
    %c0_27 = arith.constant 0 : index
    %c0_28 = arith.constant 0 : index
    %75 = vector.load %arg6[%c0_27, %c0_28] : memref<8x8xf32, #tpu.memory_space<vmem>>, vector<8x8xf32>
    tpu.vector_store %arg6[%c0_27, %c0_28], %74 {strides = array<i32>} : memref<8x8xf32, #tpu.memory_space<vmem>>, vector<8x8xf32>,
    return
  }
}

</mosaic_0001>

<llo_original>
// kernel: tpu_custom_call.1
$region0: #{tpu_custom_call.1}
  #allocation0 [shape = 'u32[]', space=smem, size = 0x4, offset = 0x4, fixed_abs, tag = 'smem constant byte address 0x4 - core index']
  #allocation1 [shape = 'u32[144,128]{1,0:T(1,128)}', space=vmem, size = 0x12000, scoped, tag = 'internal scratch']
  %s0 = inlined_call_operand.vmem [shape: s32[8], index: 0, kind: input, shape index: {}]
  %s1 = inlined_call_operand.vmem [shape: f32[2000,32], index: 1, kind: input, shape index: {}]
  %s2 = inlined_call_operand.vmem [shape: f32[32,32], index: 2, kind: input, shape index: {}]
  %s3 = inlined_call_operand.vmem [shape: f32[1,32], index: 3, kind: input, shape index: {}]
  %s4 = inlined_call_operand.vmem [shape: f32[32,8], index: 4, kind: input, shape index: {}]
  %s5 = inlined_call_operand.vmem [shape: f32[1,8], index: 5, kind: input, shape index: {}]
  %s6 = inlined_call_operand.hbm [shape: f32[8,8], index: 6, kind: output, shape index: {}]
  %s7 = sld [smem:[#allocation0]]
  $region38: #{tpu_custom_call.1} parent=0
    _
  %s9 = ssub.s32 1, %s7
  %s10 = scalar_select 0, %s9, %s7
  $region1: #{tpu_custom_call.1} parent=0
    #allocation2 [shape = 'u8[512]{0}', space=smem, size = 0x200, scoped, tag = 'input window, operand 0, single buffered']
    #allocation3 [shape = 's32[1]{0}', space=sflag, size = 0x4, scoped, tag = 'scoped memory for tpu_custom_call.1']
    #allocation4 [shape = 's32[1]{0}', space=sflag, size = 0x4, scoped, tag = 'scoped memory for tpu_custom_call.1']
    #allocation5 [shape = 'u8[4096]{0}', space=vmem, size = 0x1000, scoped, tag = 'output window, operand 0, single buffered']
    %11 = vsyncpa [#allocation4], 0
    %12 = vsyncpa [#allocation3], 0
    // Predicated region
    $region2: #{tpu_custom_call.1} parent=1 // pred_check
      _
    $region3: #{tpu_custom_call.1} parent=1 // pred_check_branch
      %14 = sbr.rel (0) target = $region5
    $region4: #{tpu_custom_call.1} parent=1 // pred_region
      %s16 = ssub.s32 16, 16
      %17 = vsyncadd [#allocation4], %s16
      %s19 = sshll.u32 %s0, 4
      %s20 = int_to_ptr.vmem [resolvable:$true] %s19
      %22 = dma.vmem_to_smem %s20, 16, [#allocation2], [#allocation4]
    $region5: #{tpu_custom_call.1} parent=1 // pred_fallthru
      _
    // Predicated region
    $region6: #{tpu_custom_call.1} parent=1 // pred_check
      _
    $region7: #{tpu_custom_call.1} parent=1 // pred_check_branch
      %24 = sbr.rel (0) target = $region9
    $region8: #{tpu_custom_call.1} parent=1 // pred_region
      _
    $region9: #{tpu_custom_call.1} parent=1 // pred_fallthru
      _
    // Predicated region
    $region10: #{tpu_custom_call.1} parent=1 // pred_check
      _
    $region11: #{tpu_custom_call.1} parent=1 // pred_check_branch
      %26 = sbr.rel (0) target = $region13
    $region12: #{tpu_custom_call.1} parent=1 // pred_region
      _
    $region13: #{tpu_custom_call.1} parent=1 // pred_fallthru
      _
    // Predicated region
    $region14: #{tpu_custom_call.1} parent=1 // pred_check
      _
    $region15: #{tpu_custom_call.1} parent=1 // pred_check_branch
      %28 = sbr.rel (0) target = $region17
    $region16: #{tpu_custom_call.1} parent=1 // pred_region
      _
    $region17: #{tpu_custom_call.1} parent=1 // pred_fallthru
      _
    // Predicated region
    $region18: #{tpu_custom_call.1} parent=1 // pred_check
      _
    $region19: #{tpu_custom_call.1} parent=1 // pred_check_branch
      %30 = sbr.rel (0) target = $region21
    $region20: #{tpu_custom_call.1} parent=1 // pred_region
      _
    $region21: #{tpu_custom_call.1} parent=1 // pred_fallthru
      _
    // Predicated region
    $region22: #{tpu_custom_call.1} parent=1 // pred_check
      _
    $region23: #{tpu_custom_call.1} parent=1 // pred_check_branch
      %32 = sbr.rel (0) target = $region25
    $region24: #{tpu_custom_call.1} parent=1 // pred_region
      _
    $region25: #{tpu_custom_call.1} parent=1 // pred_fallthru
      _
    // Predicated region
    $region26: #{tpu_custom_call.1} parent=1 // pred_check
      _
    $region27: #{tpu_custom_call.1} parent=1 // pred_check_branch
      %34 = sbr.rel (0) target = $region29
    $region28: #{tpu_custom_call.1} parent=1 // pred_region
      %35 = dma.done [#allocation4], 16
    $region29: #{tpu_custom_call.1} parent=1 // pred_fallthru
      _
    %36 = sfence
    %v37 = vld [vmem:[%s2] sm:$0xff]
    %v38 = vld [vmem:[%s2 + $0x8] sm:$0xff]
    %v39 = vld [vmem:[%s2 + $0x10] sm:$0xff]
    %v40 = vld [vmem:[%s2 + $0x18] sm:$0xff]
    %v41 = vld [vmem:[%s3] sm:$0x1]
    %s42 = sld [smem:[#allocation2]]
    %s43 = scalar_lea.vmem %s1, %s42
    %v44 = vld [vmem:[%s43] sm:$0x1]
    %v45 = vadd.f32 %v44, %v41
    %vm46 = vcmask 261120
    %v48 = vsel %vm46, 0.0, 0
    %50 = vmatprep.subr.mxu0 0.0
    %51 = vmatpush1.msra.mxu0 %v37
    %52 = vmatprep.subr.mxu0 0.0
    %53 = vmatpush1.msra.mxu0 %v38
    %54 = vmatprep.subr.mxu0 0.0
    %55 = vmatpush1.msra.mxu0 %v39
    %56 = vmatprep.subr.mxu0 0.0
    %57 = vmatpush1.msra.mxu0 %v40
    %58 = vmatprep.subr.mxu0 0.0
    %59 = vmatpush1.msra.mxu0 0.0
    %60 = vmatprep.subr.mxu0 0.0
    %61 = vmatpush1.msra.mxu0 0.0
    %62 = vmatprep.subr.mxu0 0.0
    %63 = vmatpush1.msra.mxu0 0.0
    %64 = vmatprep.subr.mxu0 0.0
    %65 = vmatpush1.msra.mxu0 0.0
    %66 = vmatprep.subr.mxu0 0.0
    %67 = vmatpush1.msra.mxu0 0.0
    %68 = vmatprep.subr.mxu0 0.0
    %69 = vmatpush1.msra.mxu0 0.0
    %70 = vmatprep.subr.mxu0 0.0
    %71 = vmatpush1.msra.mxu0 0.0
    %72 = vmatprep.subr.mxu0 0.0
    %73 = vmatpush1.msra.mxu0 0.0
    %74 = vmatprep.subr.mxu0 0.0
    %75 = vmatpush1.msra.mxu0 0.0
    %76 = vmatprep.subr.mxu0 0.0
    %77 = vmatpush1.msra.mxu0 0.0
    %78 = vmatprep.subr.mxu0 0.0
    %79 = vmatpush1.msra.mxu0 0.0
    %80 = vmatprep.subr.mxu0 0.0
    %81 = vmatpush1.msra.mxu0 0.0
    %82 = vmatprep.subr.mxu0 0.0
    %83 = vmatpush1.msra.mxu0 0.0
    %84 = vmatprep.subr.mxu0 0.0
    %85 = vmatpush1.msra.mxu0 0.0
    %86 = vmatprep.subr.mxu0 0.0
    %87 = vmatpush1.msra.mxu0 0.0
    %88 = vmatprep.subr.mxu0 0.0
    %89 = vmatpush1.msra.mxu0 0.0
    %90 = vmatprep.subr.mxu0 0.0
    %91 = vmatpush1.msra.mxu0 0.0
    %92 = vmatprep.subr.mxu0 0.0
    %93 = vmatpush1.msra.mxu0 0.0
    %94 = vmatprep.subr.mxu0 0.0
    %95 = vmatpush1.msra.mxu0 0.0
    %96 = vmatprep.subr.mxu0 0.0
    %97 = vmatpush1.msra.mxu0 0.0
    %98 = vmatprep.subr.mxu0 0.0
    %99 = vmatpush1.msra.mxu0 0.0
    %100 = vmatprep.subr.mxu0 0.0
    %101 = vmatpush1.msra.mxu0 0.0
    %102 = vmatprep.subr.mxu0 0.0
    %103 = vmatpush1.msra.mxu0 0.0
    %104 = vmatprep.subr.mxu0 0.0
    %105 = vmatpush1.msra.mxu0 0.0
    %106 = vmatprep.subr.mxu0 0.0
    %107 = vmatpush1.msra.mxu0 0.0
    %108 = vmatprep.subr.mxu0 0.0
    %109 = vmatpush1.msra.mxu0 0.0
    %110 = vmatprep.subr.mxu0 0.0
    %111 = vmatpush1.msra.mxu0 0.0
    %112 = vmatprep.subr.mxu0 0.0
    %113 = vmatpush1.msra.mxu0 0.0
    %114 = vmatprep.mubr.f32.mxu0 0.0
    %115 = vmatmul.mubr.f32.gmra.mrb[0].mxu0 %v48
    %v116 = vpop.f32.mrb[0].mxu0
    %v117 = vadd.f32 0.0, %v116
    %v118 = vpop.f32.mrb[0].mxu0
    %119 = vdwg.mxu0
    %v120 = vadd.f32 %v45, %v117
    %v121 = vtanh.pop %v120
    %s122 = sld [smem:[#allocation2 + $0x1]]
    %s123 = scalar_lea.vmem %s1, %s122
    %v124 = vld [vmem:[%s123] sm:$0x1]
    %v125 = vadd.f32 %v124, %v41
    %v127 = vsel %vm46, %v121, 0
    %129 = vmatprep.subr.mxu0 0.0
    %130 = vmatpush1.msra.mxu0 %v37
    %131 = vmatprep.subr.mxu0 0.0
    %132 = vmatpush1.msra.mxu0 %v38
    %133 = vmatprep.subr.mxu0 0.0
    %134 = vmatpush1.msra.mxu0 %v39
    %135 = vmatprep.subr.mxu0 0.0
    %136 = vmatpush1.msra.mxu0 %v40
    %137 = vmatprep.subr.mxu0 0.0
    %138 = vmatpush1.msra.mxu0 0.0
    %139 = vmatprep.subr.mxu0 0.0
    %140 = vmatpush1.msra.mxu0 0.0
    %141 = vmatprep.subr.mxu0 0.0
    %142 = vmatpush1.msra.mxu0 0.0
    %143 = vmatprep.subr.mxu0 0.0
    %144 = vmatpush1.msra.mxu0 0.0
    %145 = vmatprep.subr.mxu0 0.0
    %146 = vmatpush1.msra.mxu0 0.0
    %147 = vmatprep.subr.mxu0 0.0
    %148 = vmatpush1.msra.mxu0 0.0
    %149 = vmatprep.subr.mxu0 0.0
    %150 = vmatpush1.msra.mxu0 0.0
    %151 = vmatprep.subr.mxu0 0.0
    %152 = vmatpush1.msra.mxu0 0.0
    %153 = vmatprep.subr.mxu0 0.0
    %154 = vmatpush1.msra.mxu0 0.0
    %155 = vmatprep.subr.mxu0 0.0
    %156 = vmatpush1.msra.mxu0 0.0
    %157 = vmatprep.subr.mxu0 0.0
    %158 = vmatpush1.msra.mxu0 0.0
    %159 = vmatprep.subr.mxu0 0.0
    %160 = vmatpush1.msra.mxu0 0.0
    %161 = vmatprep.subr.mxu0 0.0
    %162 = vmatpush1.msra.mxu0 0.0
    %163 = vmatprep.subr.mxu0 0.0
    %164 = vmatpush1.msra.mxu0 0.0
    %165 = vmatprep.subr.mxu0 0.0
    %166 = vmatpush1.msra.mxu0 0.0
    %167 = vmatprep.subr.mxu0 0.0
    %168 = vmatpush1.msra.mxu0 0.0
    %169 = vmatprep.subr.mxu0 0.0
    %170 = vmatpush1.msra.mxu0 0.0
    %171 = vmatprep.subr.mxu0 0.0
    %172 = vmatpush1.msra.mxu0 0.0
    %173 = vmatprep.subr.mxu0 0.0
    %174 = vmatpush1.msra.mxu0 0.0
    %175 = vmatprep.subr.mxu0 0.0
    %176 = vmatpush1.msra.mxu0 0.0
    %177 = vmatprep.subr.mxu0 0.0
    %178 = vmatpush1.msra.mxu0 0.0
    %179 = vmatprep.subr.mxu0 0.0
    %180 = vmatpush1.msra.mxu0 0.0
    %181 = vmatprep.subr.mxu0 0.0
    %182 = vmatpush1.msra.mxu0 0.0
    %183 = vmatprep.subr.mxu0 0.0
    %184 = vmatpush1.msra.mxu0 0.0
    %185 = vmatprep.subr.mxu0 0.0
    %186 = vmatpush1.msra.mxu0 0.0
    %187 = vmatprep.subr.mxu0 0.0
    %188 = vmatpush1.msra.mxu0 0.0
    %189 = vmatprep.subr.mxu0 0.0
    %190 = vmatpush1.msra.mxu0 0.0
    %191 = vmatprep.subr.mxu0 0.0
    %192 = vmatpush1.msra.mxu0 0.0
    %193 = vmatprep.mubr.f32.mxu0 0.0
    %194 = vmatmul.mubr.f32.gmra.mrb[0].mxu0 %v127
    %v195 = vpop.f32.mrb[0].mxu0
    %v196 = vadd.f32 0.0, %v195
    %v197 = vpop.f32.mrb[0].mxu0
    %198 = vdwg.mxu0
    %v199 = vadd.f32 %v125, %v196
    %v200 = vtanh.pop %v199
    %s201 = sld [smem:[#allocation2 + $0x2]]
    %s202 = scalar_lea.vmem %s1, %s201
    %v203 = vld [vmem:[%s202] sm:$0x1]
    %v204 = vadd.f32 %v203, %v41
    %v206 = vsel %vm46, %v200, 0
    %208 = vmatprep.subr.mxu0 0.0
    %209 = vmatpush1.msra.mxu0 %v37
    %210 = vmatprep.subr.mxu0 0.0
    %211 = vmatpush1.msra.mxu0 %v38
    %212 = vmatprep.subr.mxu0 0.0
    %213 = vmatpush1.msra.mxu0 %v39
    %214 = vmatprep.subr.mxu0 0.0
    %215 = vmatpush1.msra.mxu0 %v40
    %216 = vmatprep.subr.mxu0 0.0
    %217 = vmatpush1.msra.mxu0 0.0
    %218 = vmatprep.subr.mxu0 0.0
    %219 = vmatpush1.msra.mxu0 0.0
    %220 = vmatprep.subr.mxu0 0.0
    %221 = vmatpush1.msra.mxu0 0.0
    %222 = vmatprep.subr.mxu0 0.0
    %223 = vmatpush1.msra.mxu0 0.0
    %224 = vmatprep.subr.mxu0 0.0
    %225 = vmatpush1.msra.mxu0 0.0
    %226 = vmatprep.subr.mxu0 0.0
    %227 = vmatpush1.msra.mxu0 0.0
    %228 = vmatprep.subr.mxu0 0.0
    %229 = vmatpush1.msra.mxu0 0.0
    %230 = vmatprep.subr.mxu0 0.0
    %231 = vmatpush1.msra.mxu0 0.0
    %232 = vmatprep.subr.mxu0 0.0
    %233 = vmatpush1.msra.mxu0 0.0
    %234 = vmatprep.subr.mxu0 0.0
    %235 = vmatpush1.msra.mxu0 0.0
    %236 = vmatprep.subr.mxu0 0.0
    %237 = vmatpush1.msra.mxu0 0.0
    %238 = vmatprep.subr.mxu0 0.0
    %239 = vmatpush1.msra.mxu0 0.0
    %240 = vmatprep.subr.mxu0 0.0
    %241 = vmatpush1.msra.mxu0 0.0
    %242 = vmatprep.subr.mxu0 0.0
    %243 = vmatpush1.msra.mxu0 0.0
    %244 = vmatprep.subr.mxu0 0.0
    %245 = vmatpush1.msra.mxu0 0.0
    %246 = vmatprep.subr.mxu0 0.0
    %247 = vmatpush1.msra.mxu0 0.0
    %248 = vmatprep.subr.mxu0 0.0
    %249 = vmatpush1.msra.mxu0 0.0
    %250 = vmatprep.subr.mxu0 0.0
    %251 = vmatpush1.msra.mxu0 0.0
    %252 = vmatprep.subr.mxu0 0.0
    %253 = vmatpush1.msra.mxu0 0.0
    %254 = vmatprep.subr.mxu0 0.0
    %255 = vmatpush1.msra.mxu0 0.0
    %256 = vmatprep.subr.mxu0 0.0
    %257 = vmatpush1.msra.mxu0 0.0
    %258 = vmatprep.subr.mxu0 0.0
    %259 = vmatpush1.msra.mxu0 0.0
    %260 = vmatprep.subr.mxu0 0.0
    %261 = vmatpush1.msra.mxu0 0.0
    %262 = vmatprep.subr.mxu0 0.0
    %263 = vmatpush1.msra.mxu0 0.0
    %264 = vmatprep.subr.mxu0 0.0
    %265 = vmatpush1.msra.mxu0 0.0
    %266 = vmatprep.subr.mxu0 0.0
    %267 = vmatpush1.msra.mxu0 0.0
    %268 = vmatprep.subr.mxu0 0.0
    %269 = vmatpush1.msra.mxu0 0.0
    %270 = vmatprep.subr.mxu0 0.0
    %271 = vmatpush1.msra.mxu0 0.0
    %272 = vmatprep.mubr.f32.mxu0 0.0
    %273 = vmatmul.mubr.f32.gmra.mrb[0].mxu0 %v206
    %v274 = vpop.f32.mrb[0].mxu0
    %v275 = vadd.f32 0.0, %v274
    %v276 = vpop.f32.mrb[0].mxu0
    %277 = vdwg.mxu0
    %v278 = vadd.f32 %v204, %v275
    %v279 = vtanh.pop %v278
    %s280 = sld [smem:[#allocation2 + $0x3]]
    %s281 = scalar_lea.vmem %s1, %s280
    %v282 = vld [vmem:[%s281] sm:$0x1]
    %v283 = vadd.f32 %v282, %v41
    %v285 = vsel %vm46, %v279, 0
    %287 = vmatprep.subr.mxu0 0.0
    %288 = vmatpush1.msra.mxu0 %v37
    %289 = vmatprep.subr.mxu0 0.0
    %290 = vmatpush1.msra.mxu0 %v38
    %291 = vmatprep.subr.mxu0 0.0
    %292 = vmatpush1.msra.mxu0 %v39
    %293 = vmatprep.subr.mxu0 0.0
    %294 = vmatpush1.msra.mxu0 %v40
    %295 = vmatprep.subr.mxu0 0.0
    %296 = vmatpush1.msra.mxu0 0.0
    %297 = vmatprep.subr.mxu0 0.0
    %298 = vmatpush1.msra.mxu0 0.0
    %299 = vmatprep.subr.mxu0 0.0
    %300 = vmatpush1.msra.mxu0 0.0
    %301 = vmatprep.subr.mxu0 0.0
    %302 = vmatpush1.msra.mxu0 0.0
    %303 = vmatprep.subr.mxu0 0.0
    %304 = vmatpush1.msra.mxu0 0.0
    %305 = vmatprep.subr.mxu0 0.0
    %306 = vmatpush1.msra.mxu0 0.0
    %307 = vmatprep.subr.mxu0 0.0
    %308 = vmatpush1.msra.mxu0 0.0
    %309 = vmatprep.subr.mxu0 0.0
    %310 = vmatpush1.msra.mxu0 0.0
    %311 = vmatprep.subr.mxu0 0.0
    %312 = vmatpush1.msra.mxu0 0.0
    %313 = vmatprep.subr.mxu0 0.0
    %314 = vmatpush1.msra.mxu0 0.0
    %315 = vmatprep.subr.mxu0 0.0
    %316 = vmatpush1.msra.mxu0 0.0
    %317 = vmatprep.subr.mxu0 0.0
    %318 = vmatpush1.msra.mxu0 0.0
    %319 = vmatprep.subr.mxu0 0.0
    %320 = vmatpush1.msra.mxu0 0.0
    %321 = vmatprep.subr.mxu0 0.0
    %322 = vmatpush1.msra.mxu0 0.0
    %323 = vmatprep.subr.mxu0 0.0
    %324 = vmatpush1.msra.mxu0 0.0
    %325 = vmatprep.subr.mxu0 0.0
    %326 = vmatpush1.msra.mxu0 0.0
    %327 = vmatprep.subr.mxu0 0.0
    %328 = vmatpush1.msra.mxu0 0.0
    %329 = vmatprep.subr.mxu0 0.0
    %330 = vmatpush1.msra.mxu0 0.0
    %331 = vmatprep.subr.mxu0 0.0
    %332 = vmatpush1.msra.mxu0 0.0
    %333 = vmatprep.subr.mxu0 0.0
    %334 = vmatpush1.msra.mxu0 0.0
    %335 = vmatprep.subr.mxu0 0.0
    %336 = vmatpush1.msra.mxu0 0.0
    %337 = vmatprep.subr.mxu0 0.0
    %338 = vmatpush1.msra.mxu0 0.0
    %339 = vmatprep.subr.mxu0 0.0
    %340 = vmatpush1.msra.mxu0 0.0
    %341 = vmatprep.subr.mxu0 0.0
    %342 = vmatpush1.msra.mxu0 0.0
    %343 = vmatprep.subr.mxu0 0.0
    %344 = vmatpush1.msra.mxu0 0.0
    %345 = vmatprep.subr.mxu0 0.0
    %346 = vmatpush1.msra.mxu0 0.0
    %347 = vmatprep.subr.mxu0 0.0
    %348 = vmatpush1.msra.mxu0 0.0
    %349 = vmatprep.subr.mxu0 0.0
    %350 = vmatpush1.msra.mxu0 0.0
    %351 = vmatprep.mubr.f32.mxu0 0.0
    %352 = vmatmul.mubr.f32.gmra.mrb[0].mxu0 %v285
    %v353 = vpop.f32.mrb[0].mxu0
    %v354 = vadd.f32 0.0, %v353
    %v355 = vpop.f32.mrb[0].mxu0
    %356 = vdwg.mxu0
    %v357 = vadd.f32 %v283, %v354
    %v358 = vtanh.pop %v357
    %s359 = sld [smem:[#allocation2 + $0x4]]
    %s360 = scalar_lea.vmem %s1, %s359
    %v361 = vld [vmem:[%s360] sm:$0x1]
    %v362 = vadd.f32 %v361, %v41
    %v364 = vsel %vm46, %v358, 0
    %366 = vmatprep.subr.mxu0 0.0
    %367 = vmatpush1.msra.mxu0 %v37
    %368 = vmatprep.subr.mxu0 0.0
    %369 = vmatpush1.msra.mxu0 %v38
    %370 = vmatprep.subr.mxu0 0.0
    %371 = vmatpush1.msra.mxu0 %v39
    %372 = vmatprep.subr.mxu0 0.0
    %373 = vmatpush1.msra.mxu0 %v40
    %374 = vmatprep.subr.mxu0 0.0
    %375 = vmatpush1.msra.mxu0 0.0
    %376 = vmatprep.subr.mxu0 0.0
    %377 = vmatpush1.msra.mxu0 0.0
    %378 = vmatprep.subr.mxu0 0.0
    %379 = vmatpush1.msra.mxu0 0.0
    %380 = vmatprep.subr.mxu0 0.0
    %381 = vmatpush1.msra.mxu0 0.0
    %382 = vmatprep.subr.mxu0 0.0
    %383 = vmatpush1.msra.mxu0 0.0
    %384 = vmatprep.subr.mxu0 0.0
    %385 = vmatpush1.msra.mxu0 0.0
    %386 = vmatprep.subr.mxu0 0.0
    %387 = vmatpush1.msra.mxu0 0.0
    %388 = vmatprep.subr.mxu0 0.0
    %389 = vmatpush1.msra.mxu0 0.0
    %390 = vmatprep.subr.mxu0 0.0
    %391 = vmatpush1.msra.mxu0 0.0
    %392 = vmatprep.subr.mxu0 0.0
    %393 = vmatpush1.msra.mxu0 0.0
    %394 = vmatprep.subr.mxu0 0.0
    %395 = vmatpush1.msra.mxu0 0.0
    %396 = vmatprep.subr.mxu0 0.0
    %397 = vmatpush1.msra.mxu0 0.0
    %398 = vmatprep.subr.mxu0 0.0
    %399 = vmatpush1.msra.mxu0 0.0
    %400 = vmatprep.subr.mxu0 0.0
    %401 = vmatpush1.msra.mxu0 0.0
    %402 = vmatprep.subr.mxu0 0.0
    %403 = vmatpush1.msra.mxu0 0.0
    %404 = vmatprep.subr.mxu0 0.0
    %405 = vmatpush1.msra.mxu0 0.0
    %406 = vmatprep.subr.mxu0 0.0
    %407 = vmatpush1.msra.mxu0 0.0
    %408 = vmatprep.subr.mxu0 0.0
    %409 = vmatpush1.msra.mxu0 0.0
    %410 = vmatprep.subr.mxu0 0.0
    %411 = vmatpush1.msra.mxu0 0.0
    %412 = vmatprep.subr.mxu0 0.0
    %413 = vmatpush1.msra.mxu0 0.0
    %414 = vmatprep.subr.mxu0 0.0
    %415 = vmatpush1.msra.mxu0 0.0
    %416 = vmatprep.subr.mxu0 0.0
    %417 = vmatpush1.msra.mxu0 0.0
    %418 = vmatprep.subr.mxu0 0.0
    %419 = vmatpush1.msra.mxu0 0.0
    %420 = vmatprep.subr.mxu0 0.0
    %421 = vmatpush1.msra.mxu0 0.0
    %422 = vmatprep.subr.mxu0 0.0
    %423 = vmatpush1.msra.mxu0 0.0
    %424 = vmatprep.subr.mxu0 0.0
    %425 = vmatpush1.msra.mxu0 0.0
    %426 = vmatprep.subr.mxu0 0.0
    %427 = vmatpush1.msra.mxu0 0.0
    %428 = vmatprep.subr.mxu0 0.0
    %429 = vmatpush1.msra.mxu0 0.0
    %430 = vmatprep.mubr.f32.mxu0 0.0
    %431 = vmatmul.mubr.f32.gmra.mrb[0].mxu0 %v364
    %v432 = vpop.f32.mrb[0].mxu0
    %v433 = vadd.f32 0.0, %v432
    %v434 = vpop.f32.mrb[0].mxu0
    %435 = vdwg.mxu0
    %v436 = vadd.f32 %v362, %v433
    %v437 = vtanh.pop %v436
    %s438 = sld [smem:[#allocation2 + $0x5]]
    %s439 = scalar_lea.vmem %s1, %s438
    %v440 = vld [vmem:[%s439] sm:$0x1]
    %v441 = vadd.f32 %v440, %v41
    %v443 = vsel %vm46, %v437, 0
    %445 = vmatprep.subr.mxu0 0.0
    %446 = vmatpush1.msra.mxu0 %v37
    %447 = vmatprep.subr.mxu0 0.0
    %448 = vmatpush1.msra.mxu0 %v38
    %449 = vmatprep.subr.mxu0 0.0
    %450 = vmatpush1.msra.mxu0 %v39
    %451 = vmatprep.subr.mxu0 0.0
    %452 = vmatpush1.msra.mxu0 %v40
    %453 = vmatprep.subr.mxu0 0.0
    %454 = vmatpush1.msra.mxu0 0.0
    %455 = vmatprep.subr.mxu0 0.0
    %456 = vmatpush1.msra.mxu0 0.0
    %457 = vmatprep.subr.mxu0 0.0
    %458 = vmatpush1.msra.mxu0 0.0
    %459 = vmatprep.subr.mxu0 0.0
    %460 = vmatpush1.msra.mxu0 0.0
    %461 = vmatprep.subr.mxu0 0.0
    %462 = vmatpush1.msra.mxu0 0.0
    %463 = vmatprep.subr.mxu0 0.0
    %464 = vmatpush1.msra.mxu0 0.0
    %465 = vmatprep.subr.mxu0 0.0
    %466 = vmatpush1.msra.mxu0 0.0
    %467 = vmatprep.subr.mxu0 0.0
    %468 = vmatpush1.msra.mxu0 0.0
    %469 = vmatprep.subr.mxu0 0.0
    %470 = vmatpush1.msra.mxu0 0.0
    %471 = vmatprep.subr.mxu0 0.0
    %472 = vmatpush1.msra.mxu0 0.0
    %473 = vmatprep.subr.mxu0 0.0
    %474 = vmatpush1.msra.mxu0 0.0
    %475 = vmatprep.subr.mxu0 0.0
    %476 = vmatpush1.msra.mxu0 0.0
    %477 = vmatprep.subr.mxu0 0.0
    %478 = vmatpush1.msra.mxu0 0.0
    %479 = vmatprep.subr.mxu0 0.0
    %480 = vmatpush1.msra.mxu0 0.0
    %481 = vmatprep.subr.mxu0 0.0
    %482 = vmatpush1.msra.mxu0 0.0
    %483 = vmatprep.subr.mxu0 0.0
    %484 = vmatpush1.msra.mxu0 0.0
    %485 = vmatprep.subr.mxu0 0.0
    %486 = vmatpush1.msra.mxu0 0.0
    %487 = vmatprep.subr.mxu0 0.0
    %488 = vmatpush1.msra.mxu0 0.0
    %489 = vmatprep.subr.mxu0 0.0
    %490 = vmatpush1.msra.mxu0 0.0
    %491 = vmatprep.subr.mxu0 0.0
    %492 = vmatpush1.msra.mxu0 0.0
    %493 = vmatprep.subr.mxu0 0.0
    %494 = vmatpush1.msra.mxu0 0.0
    %495 = vmatprep.subr.mxu0 0.0
    %496 = vmatpush1.msra.mxu0 0.0
    %497 = vmatprep.subr.mxu0 0.0
    %498 = vmatpush1.msra.mxu0 0.0
    %499 = vmatprep.subr.mxu0 0.0
    %500 = vmatpush1.msra.mxu0 0.0
    %501 = vmatprep.subr.mxu0 0.0
    %502 = vmatpush1.msra.mxu0 0.0
    %503 = vmatprep.subr.mxu0 0.0
    %504 = vmatpush1.msra.mxu0 0.0
    %505 = vmatprep.subr.mxu0 0.0
    %506 = vmatpush1.msra.mxu0 0.0
    %507 = vmatprep.subr.mxu0 0.0
    %508 = vmatpush1.msra.mxu0 0.0
    %509 = vmatprep.mubr.f32.mxu0 0.0
    %510 = vmatmul.mubr.f32.gmra.mrb[0].mxu0 %v443
    %v511 = vpop.f32.mrb[0].mxu0
    %v512 = vadd.f32 0.0, %v511
    %v513 = vpop.f32.mrb[0].mxu0
    %514 = vdwg.mxu0
    %v515 = vadd.f32 %v441, %v512
    %v516 = vtanh.pop %v515
    %s517 = sld [smem:[#allocation2 + $0x6]]
    %s518 = scalar_lea.vmem %s1, %s517
    %v519 = vld [vmem:[%s518] sm:$0x1]
    %v520 = vadd.f32 %v519, %v41
    %v522 = vsel %vm46, %v516, 0
    %524 = vmatprep.subr.mxu0 0.0
    %525 = vmatpush1.msra.mxu0 %v37
    %526 = vmatprep.subr.mxu0 0.0
    %527 = vmatpush1.msra.mxu0 %v38
    %528 = vmatprep.subr.mxu0 0.0
    %529 = vmatpush1.msra.mxu0 %v39
    %530 = vmatprep.subr.mxu0 0.0
    %531 = vmatpush1.msra.mxu0 %v40
    %532 = vmatprep.subr.mxu0 0.0
    %533 = vmatpush1.msra.mxu0 0.0
    %534 = vmatprep.subr.mxu0 0.0
    %535 = vmatpush1.msra.mxu0 0.0
    %536 = vmatprep.subr.mxu0 0.0
    %537 = vmatpush1.msra.mxu0 0.0
    %538 = vmatprep.subr.mxu0 0.0
    %539 = vmatpush1.msra.mxu0 0.0
    %540 = vmatprep.subr.mxu0 0.0
    %541 = vmatpush1.msra.mxu0 0.0
    %542 = vmatprep.subr.mxu0 0.0
    %543 = vmatpush1.msra.mxu0 0.0
    %544 = vmatprep.subr.mxu0 0.0
    %545 = vmatpush1.msra.mxu0 0.0
    %546 = vmatprep.subr.mxu0 0.0
    %547 = vmatpush1.msra.mxu0 0.0
    %548 = vmatprep.subr.mxu0 0.0
    %549 = vmatpush1.msra.mxu0 0.0
    %550 = vmatprep.subr.mxu0 0.0
    %551 = vmatpush1.msra.mxu0 0.0
    %552 = vmatprep.subr.mxu0 0.0
    %553 = vmatpush1.msra.mxu0 0.0
    %554 = vmatprep.subr.mxu0 0.0
    %555 = vmatpush1.msra.mxu0 0.0
    %556 = vmatprep.subr.mxu0 0.0
    %557 = vmatpush1.msra.mxu0 0.0
    %558 = vmatprep.subr.mxu0 0.0
    %559 = vmatpush1.msra.mxu0 0.0
    %560 = vmatprep.subr.mxu0 0.0
    %561 = vmatpush1.msra.mxu0 0.0
    %562 = vmatprep.subr.mxu0 0.0
    %563 = vmatpush1.msra.mxu0 0.0
    %564 = vmatprep.subr.mxu0 0.0
    %565 = vmatpush1.msra.mxu0 0.0
    %566 = vmatprep.subr.mxu0 0.0
    %567 = vmatpush1.msra.mxu0 0.0
    %568 = vmatprep.subr.mxu0 0.0
    %569 = vmatpush1.msra.mxu0 0.0
    %570 = vmatprep.subr.mxu0 0.0
    %571 = vmatpush1.msra.mxu0 0.0
    %572 = vmatprep.subr.mxu0 0.0
    %573 = vmatpush1.msra.mxu0 0.0
    %574 = vmatprep.subr.mxu0 0.0
    %575 = vmatpush1.msra.mxu0 0.0
    %576 = vmatprep.subr.mxu0 0.0
    %577 = vmatpush1.msra.mxu0 0.0
    %578 = vmatprep.subr.mxu0 0.0
    %579 = vmatpush1.msra.mxu0 0.0
    %580 = vmatprep.subr.mxu0 0.0
    %581 = vmatpush1.msra.mxu0 0.0
    %582 = vmatprep.subr.mxu0 0.0
    %583 = vmatpush1.msra.mxu0 0.0
    %584 = vmatprep.subr.mxu0 0.0
    %585 = vmatpush1.msra.mxu0 0.0
    %586 = vmatprep.subr.mxu0 0.0
    %587 = vmatpush1.msra.mxu0 0.0
    %588 = vmatprep.mubr.f32.mxu0 0.0
    %589 = vmatmul.mubr.f32.gmra.mrb[0].mxu0 %v522
    %v590 = vpop.f32.mrb[0].mxu0
    %v591 = vadd.f32 0.0, %v590
    %v592 = vpop.f32.mrb[0].mxu0
    %593 = vdwg.mxu0
    %v594 = vadd.f32 %v520, %v591
    %v595 = vtanh.pop %v594
    %s596 = sld [smem:[#allocation2 + $0x7]]
    %s597 = scalar_lea.vmem %s1, %s596
    %v598 = vld [vmem:[%s597] sm:$0x1]
    %v599 = vadd.f32 %v598, %v41
    %v601 = vsel %vm46, %v595, 0
    %603 = vmatprep.subr.mxu0 0.0
    %604 = vmatpush1.msra.mxu0 %v37
    %605 = vmatprep.subr.mxu0 0.0
    %606 = vmatpush1.msra.mxu0 %v38
    %607 = vmatprep.subr.mxu0 0.0
    %608 = vmatpush1.msra.mxu0 %v39
    %609 = vmatprep.subr.mxu0 0.0
    %610 = vmatpush1.msra.mxu0 %v40
    %611 = vmatprep.subr.mxu0 0.0
    %612 = vmatpush1.msra.mxu0 0.0
    %613 = vmatprep.subr.mxu0 0.0
    %614 = vmatpush1.msra.mxu0 0.0
    %615 = vmatprep.subr.mxu0 0.0
    %616 = vmatpush1.msra.mxu0 0.0
    %617 = vmatprep.subr.mxu0 0.0
    %618 = vmatpush1.msra.mxu0 0.0
    %619 = vmatprep.subr.mxu0 0.0
    %620 = vmatpush1.msra.mxu0 0.0
    %621 = vmatprep.subr.mxu0 0.0
    %622 = vmatpush1.msra.mxu0 0.0
    %623 = vmatprep.subr.mxu0 0.0
    %624 = vmatpush1.msra.mxu0 0.0
    %625 = vmatprep.subr.mxu0 0.0
    %626 = vmatpush1.msra.mxu0 0.0
    %627 = vmatprep.subr.mxu0 0.0
    %628 = vmatpush1.msra.mxu0 0.0
    %629 = vmatprep.subr.mxu0 0.0
    %630 = vmatpush1.msra.mxu0 0.0
    %631 = vmatprep.subr.mxu0 0.0
    %632 = vmatpush1.msra.mxu0 0.0
    %633 = vmatprep.subr.mxu0 0.0
    %634 = vmatpush1.msra.mxu0 0.0
    %635 = vmatprep.subr.mxu0 0.0
    %636 = vmatpush1.msra.mxu0 0.0
    %637 = vmatprep.subr.mxu0 0.0
    %638 = vmatpush1.msra.mxu0 0.0
    %639 = vmatprep.subr.mxu0 0.0
    %640 = vmatpush1.msra.mxu0 0.0
    %641 = vmatprep.subr.mxu0 0.0
    %642 = vmatpush1.msra.mxu0 0.0
    %643 = vmatprep.subr.mxu0 0.0
    %644 = vmatpush1.msra.mxu0 0.0
    %645 = vmatprep.subr.mxu0 0.0
    %646 = vmatpush1.msra.mxu0 0.0
    %647 = vmatprep.subr.mxu0 0.0
    %648 = vmatpush1.msra.mxu0 0.0
    %649 = vmatprep.subr.mxu0 0.0
    %650 = vmatpush1.msra.mxu0 0.0
    %651 = vmatprep.subr.mxu0 0.0
    %652 = vmatpush1.msra.mxu0 0.0
    %653 = vmatprep.subr.mxu0 0.0
    %654 = vmatpush1.msra.mxu0 0.0
    %655 = vmatprep.subr.mxu0 0.0
    %656 = vmatpush1.msra.mxu0 0.0
    %657 = vmatprep.subr.mxu0 0.0
    %658 = vmatpush1.msra.mxu0 0.0
    %659 = vmatprep.subr.mxu0 0.0
    %660 = vmatpush1.msra.mxu0 0.0
    %661 = vmatprep.subr.mxu0 0.0
    %662 = vmatpush1.msra.mxu0 0.0
    %663 = vmatprep.subr.mxu0 0.0
    %664 = vmatpush1.msra.mxu0 0.0
    %665 = vmatprep.subr.mxu0 0.0
    %666 = vmatpush1.msra.mxu0 0.0
    %667 = vmatprep.mubr.f32.mxu0 0.0
    %668 = vmatmul.mubr.f32.gmra.mrb[0].mxu0 %v601
    %v669 = vpop.f32.mrb[0].mxu0
    %v670 = vadd.f32 0.0, %v669
    %v671 = vpop.f32.mrb[0].mxu0
    %672 = vdwg.mxu0
    %v673 = vadd.f32 %v599, %v670
    %v674 = vtanh.pop %v673
    %v675 = vrot.slane %v200, 7
    %v677 = vrot.slane %v279, 6
    %v679 = vrot.slane %v358, 5
    %v681 = vrot.slane %v437, 4
    %v683 = vrot.slane %v516, 3
    %v685 = vrot.slane %v595, 2
    %v688 = vrot.slane %v674, 1
    %vm690 = vcmask 1040384
    %v691 = vsel %vm690, %v121, %v675
    %vm692 = vcmask 1041408
    %v693 = vsel %vm692, %v691, %v677
    %vm694 = vcmask 1042432
    %v695 = vsel %vm694, %v693, %v679
    %vm696 = vcmask 1043456
    %v697 = vsel %vm696, %v695, %v681
    %vm698 = vcmask 1044480
    %v699 = vsel %vm698, %v697, %v683
    %vm700 = vcmask 1045504
    %v701 = vsel %vm700, %v699, %v685
    %vm702 = vcmask 1046528
    %v703 = vsel %vm702, %v701, %v688
    %v704 = vld [vmem:[%s4] sm:$0xff]
    %v705 = vld [vmem:[%s4 + $0x8] sm:$0xff]
    %v706 = vld [vmem:[%s4 + $0x10] sm:$0xff]
    %v707 = vld [vmem:[%s4 + $0x18] sm:$0xff]
    %v708 = vld [vmem:[%s5] sm:$0x1]
    %v710 = vlaneseq
    %v711 = vshrl.u32 %v710, 7
    %v712 = vsub.s32 0, %v711
    %v713 = vrot.slane %v708, %v712
    %v716 = vsel %vm46, %v703, 0
    %718 = vmatprep.subr.mxu0 0.0
    %719 = vmatpush1.msra.mxu0 %v704
    %720 = vmatprep.subr.mxu0 0.0
    %721 = vmatpush1.msra.mxu0 %v705
    %722 = vmatprep.subr.mxu0 0.0
    %723 = vmatpush1.msra.mxu0 %v706
    %724 = vmatprep.subr.mxu0 0.0
    %725 = vmatpush1.msra.mxu0 %v707
    %726 = vmatprep.subr.mxu0 0.0
    %727 = vmatpush1.msra.mxu0 0.0
    %728 = vmatprep.subr.mxu0 0.0
    %729 = vmatpush1.msra.mxu0 0.0
    %730 = vmatprep.subr.mxu0 0.0
    %731 = vmatpush1.msra.mxu0 0.0
    %732 = vmatprep.subr.mxu0 0.0
    %733 = vmatpush1.msra.mxu0 0.0
    %734 = vmatprep.subr.mxu0 0.0
    %735 = vmatpush1.msra.mxu0 0.0
    %736 = vmatprep.subr.mxu0 0.0
    %737 = vmatpush1.msra.mxu0 0.0
    %738 = vmatprep.subr.mxu0 0.0
    %739 = vmatpush1.msra.mxu0 0.0
    %740 = vmatprep.subr.mxu0 0.0
    %741 = vmatpush1.msra.mxu0 0.0
    %742 = vmatprep.subr.mxu0 0.0
    %743 = vmatpush1.msra.mxu0 0.0
    %744 = vmatprep.subr.mxu0 0.0
    %745 = vmatpush1.msra.mxu0 0.0
    %746 = vmatprep.subr.mxu0 0.0
    %747 = vmatpush1.msra.mxu0 0.0
    %748 = vmatprep.subr.mxu0 0.0
    %749 = vmatpush1.msra.mxu0 0.0
    %750 = vmatprep.subr.mxu0 0.0
    %751 = vmatpush1.msra.mxu0 0.0
    %752 = vmatprep.subr.mxu0 0.0
    %753 = vmatpush1.msra.mxu0 0.0
    %754 = vmatprep.subr.mxu0 0.0
    %755 = vmatpush1.msra.mxu0 0.0
    %756 = vmatprep.subr.mxu0 0.0
    %757 = vmatpush1.msra.mxu0 0.0
    %758 = vmatprep.subr.mxu0 0.0
    %759 = vmatpush1.msra.mxu0 0.0
    %760 = vmatprep.subr.mxu0 0.0
    %761 = vmatpush1.msra.mxu0 0.0
    %762 = vmatprep.subr.mxu0 0.0
    %763 = vmatpush1.msra.mxu0 0.0
    %764 = vmatprep.subr.mxu0 0.0
    %765 = vmatpush1.msra.mxu0 0.0
    %766 = vmatprep.subr.mxu0 0.0
    %767 = vmatpush1.msra.mxu0 0.0
    %768 = vmatprep.subr.mxu0 0.0
    %769 = vmatpush1.msra.mxu0 0.0
    %770 = vmatprep.subr.mxu0 0.0
    %771 = vmatpush1.msra.mxu0 0.0
    %772 = vmatprep.subr.mxu0 0.0
    %773 = vmatpush1.msra.mxu0 0.0
    %774 = vmatprep.subr.mxu0 0.0
    %775 = vmatpush1.msra.mxu0 0.0
    %776 = vmatprep.subr.mxu0 0.0
    %777 = vmatpush1.msra.mxu0 0.0
    %778 = vmatprep.subr.mxu0 0.0
    %779 = vmatpush1.msra.mxu0 0.0
    %780 = vmatprep.subr.mxu0 0.0
    %781 = vmatpush1.msra.mxu0 0.0
    %782 = vmatprep.mubr.f32.mxu0 0.0
    %783 = vmatmul.mubr.f32.gmra.mrb[0].mxu0 %v716
    %v784 = vpop.f32.mrb[0].mxu0
    %v785 = vadd.f32 %v713, %v784
    %v786 = vpop.f32.mrb[0].mxu0
    %787 = vdwg.mxu0
    %vm788 = vcmask 64512
    %v789 = vsel %vm788, %v785, -inf
    %790 = vmax.xlane.f32.xlu0 %v789
    %v791 = vpop.xlane.xlu0 %790
    %v792 = vsub.f32 %v785, %v791
    %v793 = vmul.f32 %v792, 1.442695
    %v794 = vpow.pop %v793
    %v795 = vsel %vm788, %v794, 0.0
    %796 = vadd.xlane.f32.xlu0 %v795
    %v797 = vpop.xlane.xlu0 %796
    %v798 = vlog2.pop %v797
    %v799 = vmul.f32 %v798, 0.6931472
    %v800 = vsub.f32 %v792, %v799
    %801 = vst.msk [vmem:[#allocation5] sm:$0xff] %vm788, %v800
    // Predicated region
    $region30: #{tpu_custom_call.1} parent=1 // pred_check
      _
    $region31: #{tpu_custom_call.1} parent=1 // pred_check_branch
      %803 = sbr.rel (0) target = $region33
    $region32: #{tpu_custom_call.1} parent=1 // pred_region
      %s805 = ssub.s32 128, 128
      %806 = vsyncadd [#allocation3], %s805
      %s808 = sshll.u32 [#allocation5], 4
      %s809 = int_to_ptr.vmem [resolvable:$true] %s808
      %811 = dma.vmem_to_hbm [thread:$0]  %s809, 128, %s6, [#allocation3]
    $region33: #{tpu_custom_call.1} parent=1 // pred_fallthru
      _
    // Predicated region
    $region34: #{tpu_custom_call.1} parent=1 // pred_check
      _
    $region35: #{tpu_custom_call.1} parent=1 // pred_check_branch
      %813 = sbr.rel (0) target = $region37
    $region36: #{tpu_custom_call.1} parent=1 // pred_region
      %814 = dma.done [#allocation3], 128
    $region37: #{tpu_custom_call.1} parent=1 // pred_fallthru
      _
    %815 = vsyncpa [#allocation3], 1
    %816 = vsyncpa [#allocation4], 1

</llo_original>
